<compile_context>
chip_gen: v7x
topology: tpu7x:2x2x1
jax: 0.10.0
libtpu: 0.0.40
codegen_flags: <defaults>
</compile_context>

<pallas_src>
import jax
import jax.numpy as jnp
from jax.experimental import pallas as pl
from jax.experimental.pallas import tpu as pltpu


# Per-step block byte target (see header comment for the per-generation math).
_TARGET_BLOCK_BYTES = 2 * 1024 * 1024


def _sublane_tile(dtype) -> int:
    """Sublane packing tile: 8 for 32-bit, 16 for bf16/f16, 32 for int8/fp8."""
    return max(8, 32 // max(1, jnp.dtype(dtype).itemsize))


def _pick_channel_chunk(cpg: int, bytes_per_channel: int, sublane: int,
                        target_bytes: int) -> int:
    """Channel chunk cc: a sublane-aligned divisor of cpg whose block stays
    under target_bytes, else the full cpg dim (always a legal block extent)."""
    cap = max(1, target_bytes // max(1, bytes_per_channel))
    if cpg <= cap:
        return cpg
    cc = (min(cap, cpg) // sublane) * sublane
    while cc >= sublane:
        if cpg % cc == 0:
            return cc
        cc -= sublane
    return cpg  # no aligned divisor under the cap; full dim is still legal


def _pick_batch_chunk(batch: int, bytes_per_batch: int, target_bytes: int) -> int:
    """Largest divisor of `batch` whose folded block stays under target_bytes."""
    cap = max(1, target_bytes // max(1, bytes_per_batch))
    for bb in range(min(batch, cap), 0, -1):
        if batch % bb == 0:
            return bb
    return 1


# ---------------------------------------------------------------------------
# Fast path: hw % 128 == 0  ->  lane-dense pure-copy kernel.
# ---------------------------------------------------------------------------
def _shuffle_copy_kernel(x_ref, o_ref):
    # x_ref: (bb, 1, cc, hw) contiguous source channels of one input group.
    # o_ref: (bb, cc, hw) lane-dense block of the (B, cpg, groups*hw) output.
    o_ref[...] = x_ref[:, 0]


def _shuffle_lane_dense(x4, B, groups, cpg, hw, itemsize):
    sublane = _sublane_tile(x4.dtype)
    cc = _pick_channel_chunk(cpg, hw * itemsize, sublane, _TARGET_BLOCK_BYTES)
    bb = _pick_batch_chunk(B, cc * hw * itemsize, _TARGET_BLOCK_BYTES)
    n_chunks = cpg // cc

    return pl.pallas_call(
        _shuffle_copy_kernel,
        out_shape=jax.ShapeDtypeStruct((B, cpg, groups * hw), x4.dtype),
        grid_spec=pltpu.PrefetchScalarGridSpec(
            num_scalar_prefetch=0,
            # g innermost: consecutive steps write adjacent lane offsets of the
            # same output rows (HBM page locality).
            grid=(B // bb, n_chunks, groups),
            in_specs=[pl.BlockSpec((bb, 1, cc, hw),
                                   lambda b, j, g: (b, g, j, 0))],
            out_specs=pl.BlockSpec((bb, cc, hw),
                                   lambda b, j, g: (b, j, g)),
        ),
        compiler_params=pltpu.CompilerParams(
            dimension_semantics=("parallel", "parallel", "parallel")),
        cost_estimate=pl.CostEstimate(
            flops=0, transcendentals=0,
            bytes_accessed=2 * B * cpg * groups * hw * itemsize),
    )(x4)


# ---------------------------------------------------------------------------
# General path: any hw (49, 196, 784, 3136, ...)  ->  full-last-dim blocks,
# interleave done with static per-group stores inside VMEM.
# ---------------------------------------------------------------------------
def _make_interleave_kernel(groups: int):
    def kernel(x_ref, o_ref):
        # x_ref: (bb, groups, cc, hw);  o_ref: (bb, cc, groups, hw).
        # Both blocks cover the full last two dims, so no (8,128) divisibility
        # constraints apply to hw or groups.  Static unrolled per-group stores
        # realise the channel interleave in VMEM.
        for g in range(groups):
            o_ref[:, :, g, :] = x_ref[:, g, :, :]
    return kernel


def _shuffle_general(x4, B, groups, cpg, hw, itemsize):
    sublane = _sublane_tile(x4.dtype)
    cc = _pick_channel_chunk(cpg, groups * hw * itemsize, sublane,
                             _TARGET_BLOCK_BYTES)
    bb = _pick_batch_chunk(B, groups * cc * hw * itemsize, _TARGET_BLOCK_BYTES)
    n_chunks = cpg // cc

    out4 = pl.pallas_call(
        _make_interleave_kernel(groups),
        out_shape=jax.ShapeDtypeStruct((B, cpg, groups, hw), x4.dtype),
        grid_spec=pltpu.PrefetchScalarGridSpec(
            num_scalar_prefetch=0,
            grid=(B // bb, n_chunks),
            in_specs=[pl.BlockSpec((bb, groups, cc, hw),
                                   lambda b, j: (b, 0, j, 0))],
            out_specs=pl.BlockSpec((bb, cc, groups, hw),
                                   lambda b, j: (b, j, 0, 0)),
        ),
        compiler_params=pltpu.CompilerParams(
            dimension_semantics=("parallel", "parallel")),
        cost_estimate=pl.CostEstimate(
            flops=0, transcendentals=0,
            bytes_accessed=2 * B * cpg * groups * hw * itemsize),
    )(x4)
    return out4.reshape(B, cpg, groups * hw)


# ---------------------------------------------------------------------------
# Public wrapper.
# ---------------------------------------------------------------------------
def channel_shuffle(x: jax.Array, groups: int) -> jax.Array:
    """Pallas TPU channel shuffle.  x: (B, C, H, W) NCHW."""
    B, C, H, W = x.shape
    if C % groups != 0:
        raise ValueError("channels must be divisible by groups")
    cpg = C // groups
    hw = H * W
    itemsize = jnp.dtype(x.dtype).itemsize

    # Degenerate cases: the shuffle is the identity permutation.
    if groups == 1 or cpg == 1 or B == 0 or C == 0 or hw == 0:
        return x

    # Free metadata reshape: contiguous NCHW -> (B, groups, cpg, H*W).
    x4 = x.reshape(B, groups, cpg, hw)

    if hw % 128 == 0:
        out3 = _shuffle_lane_dense(x4, B, groups, cpg, hw, itemsize)
    else:
        out3 = _shuffle_general(x4, B, groups, cpg, hw, itemsize)

    # Free reshape: (B, cpg, groups*hw) row-major == (B, cpg, groups, H, W),
    # so output channel k = cp*groups + g holds input channel g*cpg + cp.
    return out3.reshape(B, C, H, W)


class Shuffle:
    """JAX/Pallas counterpart of the PyTorch channel Shuffle module."""

    def __init__(self, groups: int):
        self.groups = groups

    def __call__(self, x: jax.Array) -> jax.Array:
        return channel_shuffle(x, self.groups)


def _reference_channel_shuffle(x: jnp.ndarray, groups: int) -> jnp.ndarray:
    b, c, h, w = x.shape
    cpg = c // groups
    y = x.reshape(b, groups, cpg, h, w)
    y = jnp.transpose(y, (0, 2, 1, 3, 4))
    return y.reshape(b, c, h, w)


if __name__ == "__main__":
    groups = 4
    module = Shuffle(groups)

    # 1) Aligned spatial size (hw = 256, multiple of 128): lane-dense fast
    #    path; grid has an even parallel step count for the v7x 2-TC split.
    B, C, H, W = 2, 32, 16, 16
    x = jax.random.normal(jax.random.PRNGKey(0), (B, C, H, W), dtype=jnp.float32)
    out = jax.block_until_ready(module(x))
    ref = _reference_channel_shuffle(x, groups)
    assert out.shape == (B, C, H, W) and out.dtype == x.dtype
    assert jnp.array_equal(out, ref), "fast-path channel shuffle mismatch"

    # 2) ShuffleNet-style unaligned spatial size (7x7 -> hw = 49): general
    #    path with full-last-dim blocks (no padding, no masked lane layout
    #    constraints).
    x2 = jax.random.normal(jax.random.PRNGKey(0), (2, 32, 7, 7), dtype=jnp.float32)
    out2 = jax.block_until_ready(module(x2))
    ref2 = _reference_channel_shuffle(x2, groups)
    assert out2.shape == x2.shape and out2.dtype == x2.dtype
    assert jnp.array_equal(out2, ref2), "general-path channel shuffle mismatch"

    print("KERNEL_OK")
</pallas_src>

<mosaic_0001>
module attributes {stable_mosaic.version = 11 : i64} {
  func.func @_shuffle_copy_kernel(%arg0: i32, %arg1: i32, %arg2: i32, %arg3: memref<2x1x8x256xf32, #tpu.memory_space<vmem>>, %arg4: memref<2x8x256xf32, #tpu.memory_space<vmem>>) attributes {dimension_semantics = [#tpu.dimension_semantics<parallel>, #tpu.dimension_semantics<parallel>, #tpu.dimension_semantics<parallel>], iteration_bounds = array<i64: 1, 1, 4>, scalar_prefetch = 0 : i64, scratch_operands = 0 : i64, tpu.core_type = #tpu.core_type<tc>, window_params = [{transform_indices = @transform_0, window_bounds = array<i64: 2, 1, 8, 256>}, {transform_indices = @transform_1, window_bounds = array<i64: 2, 8, 256>}]} {
    %c0 = arith.constant 0 : index
    %c0_0 = arith.constant 0 : index
    %c0_1 = arith.constant 0 : index
    %c0_2 = arith.constant 0 : index
    %0 = vector.load %arg3[%c0, %c0_0, %c0_1, %c0_2] : memref<2x1x8x256xf32, #tpu.memory_space<vmem>>, vector<2x1x8x256xf32>
    %1 = vector.shape_cast %0 : vector<2x1x8x256xf32> to vector<2x8x256xf32>
    %c0_3 = arith.constant 0 : index
    %c0_4 = arith.constant 0 : index
    %c0_5 = arith.constant 0 : index
    %2 = vector.load %arg4[%c0_3, %c0_4, %c0_5] : memref<2x8x256xf32, #tpu.memory_space<vmem>>, vector<2x8x256xf32>
    tpu.vector_store %arg4[%c0_3, %c0_4, %c0_5], %1 {strides = array<i32>} : memref<2x8x256xf32, #tpu.memory_space<vmem>>, vector<2x8x256xf32>,
    return
  }
  func.func @transform_0(%arg0: i32, %arg1: i32, %arg2: i32) -> (i32, i32, i32, i32) {
    %c0_i32 = arith.constant 0 : i32
    %c0_i32_0 = arith.constant 0 : i32
    return %arg0, %arg2, %arg1, %c0_i32 : i32, i32, i32, i32
  }
  func.func @transform_1(%arg0: i32, %arg1: i32, %arg2: i32) -> (i32, i32, i32) {
    %c0_i32 = arith.constant 0 : i32
    return %arg0, %arg1, %arg2 : i32, i32, i32
  }
}

</mosaic_0001>

<llo_original>
// kernel: tpu_custom_call.1
$region0: #{tpu_custom_call.1}
  #allocation0 [shape = 'u32[]', space=smem, size = 0x4, offset = 0x4, fixed_abs, tag = 'smem constant byte address 0x4 - core index']
  #allocation1 [shape = 'u32[144,128]{1,0:T(1,128)}', space=vmem, size = 0x12000, scoped, tag = 'internal scratch']
  %s0 = inlined_call_operand.hbm [shape: f32[2,4,8,256], index: 0, kind: input, shape index: {}]
  %s1 = inlined_call_operand.hbm [shape: f32[2,8,1024], index: 1, kind: output, shape index: {}]
  %s2 = sld [smem:[#allocation0]]
  $region41: #{tpu_custom_call.1} parent=0
    _
  %s4 = ssub.s32 1, %s2
  %s5 = scalar_select 0, %s4, %s2
  $region1: #{tpu_custom_call.1} parent=0
    #allocation2 [shape = 'u8[32768]{0}', space=vmem, size = 0x8000, scoped, tag = 'input window, operand 0']
    #allocation3 [shape = 's32[2]{0}', space=sflag, size = 0x8, scoped, tag = 'scoped memory for tpu_custom_call.1']
    #allocation4 [shape = 's32[2]{0}', space=sflag, size = 0x8, scoped, tag = 'scoped memory for tpu_custom_call.1']
    #allocation5 [shape = 'u8[32768]{0}', space=vmem, size = 0x8000, scoped, tag = 'output window, operand 0']
    %6 = vsyncpa [#allocation3], 0
    %s7 = scalar_lea.sflag [#allocation3], 1
    %8 = vsyncpa %s7, 0
    %9 = vsyncpa [#allocation4], 0
    %s10 = scalar_lea.sflag [#allocation4], 1
    %11 = vsyncpa %s10, 0
    loop: start=0, step=1, limit=6
    $region2: #{tpu_custom_call.1} parent=1 // loop_pre_header
      _
    $region3: #{tpu_custom_call.1} parent=1 // loop_header
      %s13 = sphi 0, %s17
      %p14 = scmp.ge.s32.totalorder %s13, 6
      %s20 = sphi 0, %s39
      %s21 = sphi 0, %s35
      %s22 = sphi 0, %s31
      %s23 = sphi 0, %s20
      %s24 = sphi 0, %s21
      %s25 = sphi 0, %s22
      %s26 = sphi 0, %s23
      %s27 = sphi 0, %s24
      %s28 = sphi 0, %s25
      %s46 = sphi 0, %s48
      %s49 = sphi 0, %s46
      %s50 = sphi 0, %s49
      %s66 = sphi 0, %s50
      %s76 = sphi 0, %s78
      %s79 = sphi 0, %s76
      %s80 = sphi 0, %s79
      %s96 = sphi 0, %s80
    $region4: #{tpu_custom_call.1} parent=1 // loop_header_branch
      %16 = sbr.rel (%p14) target = $region8
    $region5: #{tpu_custom_call.1} parent=1 // loop_body
      %s18 = ssub.s32 %s13, 1
      %s19 = ssub.s32 %s13, 2
      %s29 = sadd.s32 1, %s22
      %p30 = scmp.ge.s32.totalorder %s29, 4
      %s31 = scalar_select %p30, 0, %s29
      %s32 = sadd.s32 1, %s21
      %s33 = scalar_select %p30, %s32, %s21
      %p34 = scmp.ge.s32.totalorder %s33, 1
      %s35 = scalar_select %p34, 0, %s33
      %s36 = sadd.s32 1, %s20
      %s37 = scalar_select %p34, %s36, %s20
      %p38 = scmp.ge.s32.totalorder %s37, 1
      %s39 = scalar_select %p38, 0, %s37
      %s40 = ssub.s32 %s20, %s39
      %s41 = ssub.s32 %s22, %s31
      %s42 = sor.u32 %s40, %s41
      %s43 = ssub.s32 %s21, %s35
      %s44 = sor.u32 %s42, %s43
      %p45 = scmp.eq.s32.totalorder %s44, 0
      %s47 = sadd.s32 %s46, 1
      %s48 = scalar_select %p45, %s46, %s47
      %p51 = pneg %p45
      %p52 = scmp.eq.s32.totalorder %s13, 3
      %p53 = por %p51, %p52
      %p54 = scmp.ne.s32.totalorder %s46, %s49
      %p55 = scmp.eq.s32.totalorder %s13, 0
      %p56 = por %p54, %p55
      %p57 = scmp.ne.s32.totalorder %s46, %s49
      %p58 = scmp.eq.s32.totalorder %s18, 3
      %p59 = por %p57, %p58
      %p60 = scmp.ne.s32.totalorder %s49, %s50
      %p61 = scmp.eq.s32.totalorder %s18, 0
      %p62 = por %p60, %p61
      %p63 = scmp.ne.s32.totalorder %s49, %s50
      %p64 = scmp.eq.s32.totalorder %s19, 3
      %p65 = por %p63, %p64
      %p67 = scmp.ne.s32.totalorder %s50, %s66
      %p68 = scmp.eq.s32.totalorder %s19, 0
      %p69 = por %p67, %p68
      %s70 = ssub.s32 %s20, %s39
      %s71 = ssub.s32 %s21, %s35
      %s72 = sor.u32 %s70, %s71
      %s73 = ssub.s32 %s22, %s31
      %s74 = sor.u32 %s72, %s73
      %p75 = scmp.eq.s32.totalorder %s74, 0
      %s77 = sadd.s32 %s76, 1
      %s78 = scalar_select %p75, %s76, %s77
      %p81 = pneg %p75
      %p82 = scmp.eq.s32.totalorder %s13, 3
      %p83 = por %p81, %p82
      %p84 = scmp.ne.s32.totalorder %s76, %s79
      %p85 = scmp.eq.s32.totalorder %s13, 0
      %p86 = por %p84, %p85
      %p87 = scmp.ne.s32.totalorder %s76, %s79
      %p88 = scmp.eq.s32.totalorder %s18, 3
      %p89 = por %p87, %p88
      %p90 = scmp.ne.s32.totalorder %s79, %s80
      %p91 = scmp.eq.s32.totalorder %s18, 0
      %p92 = por %p90, %p91
      %p93 = scmp.ne.s32.totalorder %s79, %s80
      %p94 = scmp.eq.s32.totalorder %s19, 3
      %p95 = por %p93, %p94
      %p97 = scmp.ne.s32.totalorder %s80, %s96
      %p98 = scmp.eq.s32.totalorder %s19, 0
      %p99 = por %p97, %p98
      %p100 = scmp.le.s32.totalorder 1, %s13
      %p101 = scmp.lt.s32.totalorder %s13, 5
      %p102 = pnand %p100, %p101
      %p103 = pneg %p102
      // Predicated region
      $region9: #{tpu_custom_call.1} parent=5 // pred_check
        _
      $region10: #{tpu_custom_call.1} parent=5 // pred_check_branch
        %105 = sbr.rel (%p102) target = $region12
      $region11: #{tpu_custom_call.1} parent=5 // pred_region
        %s106 = ssub.s32 %s13, 1
      $region12: #{tpu_custom_call.1} parent=5 // pred_fallthru
        _
      %p107 = scmp.lt.s32.totalorder %s13, 4
      // Predicated region
      $region13: #{tpu_custom_call.1} parent=5 // pred_check
        %p108 = pneg %p107
      $region14: #{tpu_custom_call.1} parent=5 // pred_check_branch
        %110 = sbr.rel (%p108) target = $region16
      $region15: #{tpu_custom_call.1} parent=5 // pred_region
        // Predicated region
        $region17: #{tpu_custom_call.1} parent=15 // pred_check
          %p111 = pneg %p56
        $region18: #{tpu_custom_call.1} parent=15 // pred_check_branch
          %113 = sbr.rel (%p111) target = $region20
        $region19: #{tpu_custom_call.1} parent=15 // pred_region
          %s114 = sand.u32 %s46, 1
          %s115 = scalar_lea.sflag [#allocation3], %s114
          %s116 = sand.u32 %s46, 1
          %s117 = smul.addr %s116, 32
          %s118 = scalar_lea.vmem [#allocation2], %s117
          %s119 = smul.u32 2, %s20
          %s121 = ssub.s32 512, 512
          %122 = vsyncadd %s115, %s121
          %s123 = smul.addr %s21, 2
          %s124 = smul.addr %s22, 2
          %s125 = sadd.s32 %s123, %s124
          %s126 = smul.addr %s119, 8
          %s127 = sadd.s32 %s125, %s126
          %s128 = smul.addr %s127, 128
          %s129 = scalar_lea.hbm %s0, %s128
          %s130 = sshll.u32 %s118, 4
          %s131 = int_to_ptr.vmem [resolvable:$true] %s130
          %136 = dma.hbm_to_vmem [thread:$0]  %s129, 512, %s131, %s115, 1024, 256, 16
        $region20: #{tpu_custom_call.1} parent=15 // pred_fallthru
          _
      $region16: #{tpu_custom_call.1} parent=5 // pred_fallthru
        _
      %p137 = scmp.le.s32.totalorder 1, %s13
      %p138 = scmp.lt.s32.totalorder %s13, 5
      %p139 = pnand %p137, %p138
      %p140 = pneg %p139
      // Predicated region
      $region21: #{tpu_custom_call.1} parent=5 // pred_check
        _
      $region22: #{tpu_custom_call.1} parent=5 // pred_check_branch
        %142 = sbr.rel (%p139) target = $region24
      $region23: #{tpu_custom_call.1} parent=5 // pred_region
        %s143 = ssub.s32 %s13, 1
        %s144 = sand.u32 %s49, 1
        %s145 = scalar_lea.sflag [#allocation3], %s144
        %s146 = sand.u32 %s49, 1
        %s147 = smul.addr %s146, 32
        %s148 = scalar_lea.vmem [#allocation2], %s147
        // Predicated region
        $region25: #{tpu_custom_call.1} parent=23 // pred_check
          %p149 = pneg %p62
        $region26: #{tpu_custom_call.1} parent=23 // pred_check_branch
          %151 = sbr.rel (%p149) target = $region28
        $region27: #{tpu_custom_call.1} parent=23 // pred_region
          %152 = dma.done %s145, 512
        $region28: #{tpu_custom_call.1} parent=23 // pred_fallthru
          _
        %s153 = sand.u32 %s49, 1
        %s154 = scalar_lea.sflag [#allocation3], %s153
        %s155 = sand.u32 %s49, 1
        %s156 = smul.addr %s155, 32
        %s157 = scalar_lea.vmem [#allocation2], %s156
        %p158 = pneg %p62
        %p159 = pneg %p59
        %p160 = pneg %p92
        %p161 = pneg %p89
        %s162 = sand.u32 %s79, 1
        %s163 = scalar_lea.sflag [#allocation4], %s162
        %s164 = sand.u32 %s79, 1
        %s165 = smul.addr %s164, 32
        %s166 = scalar_lea.vmem [#allocation5], %s165
        %s167 = smul.u32 2, %s23
        %s168 = smul.u32 2, %s23
        %s169 = smul.u32 2, %s25
        %v170 = vld [vmem:[%s148] sm:$0xff]
        %v171 = vld [vmem:[%s148 + $0x8] sm:$0xff]
        %v172 = vld [vmem:[%s148 + $0x10] sm:$0xff]
        %v173 = vld [vmem:[%s148 + $0x18] sm:$0xff]
        %174 = vst [vmem:[%s166] sm:$0xff] %v170
        %175 = vst [vmem:[%s166 + $0x8] sm:$0xff] %v171
        %176 = vst [vmem:[%s166 + $0x10] sm:$0xff] %v172
        %177 = vst [vmem:[%s166 + $0x18] sm:$0xff] %v173
        %s178 = sand.u32 %s79, 1
        %s179 = scalar_lea.sflag [#allocation4], %s178
        %s180 = sand.u32 %s79, 1
        %s181 = smul.addr %s180, 32
        %s182 = scalar_lea.vmem [#allocation5], %s181
        // Predicated region
        $region29: #{tpu_custom_call.1} parent=23 // pred_check
          %p183 = pneg %p89
        $region30: #{tpu_custom_call.1} parent=23 // pred_check_branch
          %185 = sbr.rel (%p183) target = $region32
        $region31: #{tpu_custom_call.1} parent=23 // pred_region
          %s186 = smul.u32 2, %s23
          %s187 = smul.u32 2, %s25
          %s189 = ssub.s32 512, 512
          %190 = vsyncadd %s179, %s189
          %s191 = smul.addr %s24, 8
          %s192 = sadd.s32 %s187, %s191
          %s193 = smul.addr %s186, 8
          %s194 = sadd.s32 %s192, %s193
          %s195 = smul.addr %s194, 128
          %s196 = scalar_lea.hbm %s1, %s195
          %s197 = sshll.u32 %s182, 4
          %s198 = int_to_ptr.vmem [resolvable:$true] %s197
          %203 = dma.vmem_to_hbm [thread:$0]  %s198, 512, %s196, %s179, 256, 1024, 16
        $region32: #{tpu_custom_call.1} parent=23 // pred_fallthru
          _
      $region24: #{tpu_custom_call.1} parent=5 // pred_fallthru
        _
      %p204 = scmp.le.s32.totalorder 2, %s13
      // Predicated region
      $region33: #{tpu_custom_call.1} parent=5 // pred_check
        %p205 = pneg %p204
      $region34: #{tpu_custom_call.1} parent=5 // pred_check_branch
        %207 = sbr.rel (%p205) target = $region36
      $region35: #{tpu_custom_call.1} parent=5 // pred_region
        %s208 = ssub.s32 %s13, 2
        // Predicated region
        $region37: #{tpu_custom_call.1} parent=35 // pred_check
          %p209 = pneg %p95
        $region38: #{tpu_custom_call.1} parent=35 // pred_check_branch
          %211 = sbr.rel (%p209) target = $region40
        $region39: #{tpu_custom_call.1} parent=35 // pred_region
          %s212 = sand.u32 %s80, 1
          %s213 = scalar_lea.sflag [#allocation4], %s212
          %s214 = sand.u32 %s80, 1
          %s215 = smul.addr %s214, 32
          %s216 = scalar_lea.vmem [#allocation5], %s215
          %217 = dma.done %s213, 512
        $region40: #{tpu_custom_call.1} parent=35 // pred_fallthru
          _
      $region36: #{tpu_custom_call.1} parent=5 // pred_fallthru
        _
    $region6: #{tpu_custom_call.1} parent=1 // loop_footer
      %s17 = sadd.s32 1, %s13
    $region7: #{tpu_custom_call.1} parent=1 // loop_footer_branch
      %12 = sbr.rel target = $region3
    $region8: #{tpu_custom_call.1} parent=1 // loop_exit
      _
    %218 = vsyncpa [#allocation3], 1
    %s219 = scalar_lea.sflag [#allocation3], 1
    %220 = vsyncpa %s219, 1
    %221 = vsyncpa [#allocation4], 1
    %s222 = scalar_lea.sflag [#allocation4], 1
    %223 = vsyncpa %s222, 1

</llo_original>
